<compile_context>
chip_gen: v5e
topology: v5e:2x2
jax: 0.10.0
libtpu: 0.0.40
codegen_flags: <defaults>
</compile_context>

<pallas_src>
import jax
import jax.numpy as jnp
from jax.experimental import pallas as pl
from jax.experimental.pallas import tpu as pltpu


def _lane_pool_kernel(kernel_size, C):
    """Window folded onto lanes: x_ref (1, TL, kernel_size*C) -> o_ref (1, TL, C)."""
    def kernel(x_ref, o_ref):
        x = x_ref[...]
        r = x[:, :, 0:C]
        for k in range(1, kernel_size):
            r = jnp.maximum(r, x[:, :, k * C:(k + 1) * C])
        o_ref[...] = r
    return kernel


def _strided_pool_kernel(kernel_size, stride, out_len):
    """General fallback (overlapping windows): strided slices over the L axis."""
    def kernel(x_ref, o_ref):
        x = x_ref[...]  # (1, L, C)
        result = None
        for k in range(kernel_size):
            sl = jax.lax.slice(
                x,
                start_indices=(0, k, 0),
                limit_indices=(1, k + (out_len - 1) * stride + 1, x.shape[2]),
                strides=(1, stride, 1),
            )  # (1, out_len, C)
            result = sl if result is None else jnp.maximum(result, sl)
        o_ref[...] = result
    return kernel


def _pick_row_tile(out_len, row_bytes, target_bytes=1 << 20):
    """Largest multiple-of-8 row tile whose input slab is ~target_bytes (or full extent)."""
    if out_len * row_bytes <= target_bytes:
        return out_len
    tl = max(8, (target_bytes // max(row_bytes, 1)) // 8 * 8)
    return min(tl, out_len)


def maxpool_layer(x, kernel_size=2, stride=2):
    """Pallas TPU MaxPoolLayer.forward: (B, L, C) -> (B, (L-k)//s + 1, C)."""
    B, L, C = x.shape
    out_len = (L - kernel_size) // stride + 1
    itemsize = jnp.dtype(x.dtype).itemsize

    if stride == kernel_size:
        # Non-overlapping windows: fold the window onto the lane axis (free reshape).
        L_used = out_len * kernel_size
        xf = x[:, :L_used, :].reshape(B, out_len, kernel_size * C)

        row_bytes = kernel_size * C * itemsize
        tl = _pick_row_tile(out_len, row_bytes)
        grid = (B, pl.cdiv(out_len, tl))

        cost = pl.CostEstimate(
            flops=B * out_len * C * (kernel_size - 1),
            transcendentals=0,
            bytes_accessed=(B * out_len * kernel_size * C + B * out_len * C) * itemsize,
        )

        return pl.pallas_call(
            _lane_pool_kernel(kernel_size, C),
            out_shape=jax.ShapeDtypeStruct((B, out_len, C), x.dtype),
            grid_spec=pl.GridSpec(
                grid=grid,
                in_specs=[pl.BlockSpec((1, tl, kernel_size * C),
                                       lambda b, t: (b, t, 0))],
                out_specs=pl.BlockSpec((1, tl, C), lambda b, t: (b, t, 0)),
            ),
            compiler_params=pltpu.CompilerParams(
                dimension_semantics=("parallel", "parallel"),
            ),
            cost_estimate=cost,
        )(xf)

    # Overlapping-window fallback (not hit by the module's defaults k=2, s=2).
    # TODO(synk): tile L with halos for overlapping windows if this path sees real sizes.
    return pl.pallas_call(
        _strided_pool_kernel(kernel_size, stride, out_len),
        out_shape=jax.ShapeDtypeStruct((B, out_len, C), x.dtype),
        grid_spec=pl.GridSpec(
            grid=(B,),
            in_specs=[pl.BlockSpec((1, L, C), lambda b: (b, 0, 0))],
            out_specs=pl.BlockSpec((1, out_len, C), lambda b: (b, 0, 0)),
        ),
        compiler_params=pltpu.CompilerParams(
            dimension_semantics=("parallel",),
        ),
    )(x)


def maxpool_layer_ref(x, kernel_size=2, stride=2):
    """Pure-JAX reference (mirrors nn.MaxPool1d over the seq axis)."""
    B, L, C = x.shape
    out_len = (L - kernel_size) // stride + 1
    slices = [x[:, k: k + (out_len - 1) * stride + 1: stride, :]
              for k in range(kernel_size)]
    return jnp.stack(slices, axis=0).max(axis=0)


if __name__ == "__main__":
    key = jax.random.PRNGKey(0)
    B, L, C = 2, 16, 32  # (batch, seq, hidden) — matches the module's usage
    x = jax.random.normal(key, (B, L, C), dtype=jnp.float32)

    out = jax.block_until_ready(maxpool_layer(x, kernel_size=2, stride=2))
    ref = maxpool_layer_ref(x, kernel_size=2, stride=2)

    assert out.shape == (B, L // 2, C), out.shape
    assert jnp.allclose(out, ref), "mismatch vs reference"
    print("KERNEL_OK")
</pallas_src>

<mosaic_0001>
module attributes {stable_mosaic.version = 11 : i64} {
  func.func @kernel(%arg0: i32, %arg1: i32, %arg2: memref<1x8x64xf32, #tpu.memory_space<vmem>>, %arg3: memref<1x8x32xf32, #tpu.memory_space<vmem>>) attributes {dimension_semantics = [#tpu.dimension_semantics<parallel>, #tpu.dimension_semantics<parallel>], iteration_bounds = array<i64: 2, 1>, scalar_prefetch = 0 : i64, scratch_operands = 0 : i64, tpu.core_type = #tpu.core_type<tc>, window_params = [{transform_indices = @transform_0, window_bounds = array<i64: 1, 8, 64>}, {transform_indices = @transform_1, window_bounds = array<i64: 1, 8, 32>}]} {
    %c0 = arith.constant 0 : index
    %c0_0 = arith.constant 0 : index
    %c0_1 = arith.constant 0 : index
    %0 = vector.load %arg2[%c0, %c0_0, %c0_1] : memref<1x8x64xf32, #tpu.memory_space<vmem>>, vector<1x8x64xf32>
    %1 = vector.extract_strided_slice %0 {offsets = [0, 0, 0], sizes = [1, 8, 32], strides = [1, 1, 1]} : vector<1x8x64xf32> to vector<1x8x32xf32>
    %2 = vector.extract_strided_slice %0 {offsets = [0, 0, 32], sizes = [1, 8, 32], strides = [1, 1, 1]} : vector<1x8x64xf32> to vector<1x8x32xf32>
    %3 = arith.maximumf %1, %2 : vector<1x8x32xf32>
    %c0_2 = arith.constant 0 : index
    %c0_3 = arith.constant 0 : index
    %c0_4 = arith.constant 0 : index
    %4 = vector.load %arg3[%c0_2, %c0_3, %c0_4] : memref<1x8x32xf32, #tpu.memory_space<vmem>>, vector<1x8x32xf32>
    tpu.vector_store %arg3[%c0_2, %c0_3, %c0_4], %3 {strides = array<i32>} : memref<1x8x32xf32, #tpu.memory_space<vmem>>, vector<1x8x32xf32>,
    return
  }
  func.func @transform_0(%arg0: i32, %arg1: i32) -> (i32, i32, i32) {
    %c0_i32 = arith.constant 0 : i32
    %c0_i32_0 = arith.constant 0 : i32
    return %arg0, %arg1, %c0_i32 : i32, i32, i32
  }
  func.func @transform_1(%arg0: i32, %arg1: i32) -> (i32, i32, i32) {
    %c0_i32 = arith.constant 0 : i32
    %c0_i32_0 = arith.constant 0 : i32
    return %arg0, %arg1, %c0_i32 : i32, i32, i32
  }
}

</mosaic_0001>

<llo_original>
// kernel: tpu_custom_call.1
$region0: #{tpu_custom_call.1}
  #allocation0 [shape = 'u32[]', space=smem, size = 0x4, offset = 0x4, fixed_abs, tag = 'smem constant byte address 0x4 - core index']
  #allocation1 [shape = 'u32[72,128]{1,0:T(1,128)}', space=vmem, size = 0x9000, scoped, tag = 'internal scratch']
  %s0 = inlined_call_operand.hbm [shape: f32[2,8,64], index: 0, kind: input, shape index: {}]
  %s1 = inlined_call_operand.hbm [shape: f32[2,8,32], index: 1, kind: output, shape index: {}]
  %s2 = sld [smem:[#allocation0]]
  $region41: #{tpu_custom_call.1} parent=0
    _
  %s4 = ssub.s32 1, %s2
  %s5 = scalar_select 0, %s4, %s2
  $region1: #{tpu_custom_call.1} parent=0
    #allocation2 [shape = 'u8[8192]{0}', space=vmem, size = 0x2000, scoped, tag = 'input window, operand 0']
    #allocation3 [shape = 's32[2]{0}', space=sflag, size = 0x8, scoped, tag = 'scoped memory for tpu_custom_call.1']
    #allocation4 [shape = 's32[2]{0}', space=sflag, size = 0x8, scoped, tag = 'scoped memory for tpu_custom_call.1']
    #allocation5 [shape = 'u8[8192]{0}', space=vmem, size = 0x2000, scoped, tag = 'output window, operand 0']
    %6 = vsyncpa [#allocation3], 0
    %s7 = scalar_lea.sflag [#allocation3], 1
    %8 = vsyncpa %s7, 0
    %9 = vsyncpa [#allocation4], 0
    %s10 = scalar_lea.sflag [#allocation4], 1
    %11 = vsyncpa %s10, 0
    loop: start=0, step=1, limit=4
    $region2: #{tpu_custom_call.1} parent=1 // loop_pre_header
      _
    $region3: #{tpu_custom_call.1} parent=1 // loop_header
      %s13 = sphi 0, %s17
      %p14 = scmp.ge.s32.totalorder %s13, 4
      %s20 = sphi 0, %s32
      %s21 = sphi 0, %s28
      %s22 = sphi 0, %s20
      %s23 = sphi 0, %s21
      %s24 = sphi 0, %s22
      %s25 = sphi 0, %s23
      %s37 = sphi 0, %s39
      %s40 = sphi 0, %s37
      %s41 = sphi 0, %s40
      %s57 = sphi 0, %s41
      %s65 = sphi 0, %s67
      %s68 = sphi 0, %s65
      %s69 = sphi 0, %s68
      %s85 = sphi 0, %s69
    $region4: #{tpu_custom_call.1} parent=1 // loop_header_branch
      %16 = sbr.rel (%p14) target = $region8
    $region5: #{tpu_custom_call.1} parent=1 // loop_body
      %s18 = ssub.s32 %s13, 1
      %s19 = ssub.s32 %s13, 2
      %s26 = sadd.s32 1, %s21
      %p27 = scmp.ge.s32.totalorder %s26, 1
      %s28 = scalar_select %p27, 0, %s26
      %s29 = sadd.s32 1, %s20
      %s30 = scalar_select %p27, %s29, %s20
      %p31 = scmp.ge.s32.totalorder %s30, 2
      %s32 = scalar_select %p31, 0, %s30
      %s33 = ssub.s32 %s20, %s32
      %s34 = ssub.s32 %s21, %s28
      %s35 = sor.u32 %s33, %s34
      %p36 = scmp.eq.s32.totalorder %s35, 0
      %s38 = sadd.s32 %s37, 1
      %s39 = scalar_select %p36, %s37, %s38
      %p42 = pneg %p36
      %p43 = scmp.eq.s32.totalorder %s13, 1
      %p44 = por %p42, %p43
      %p45 = scmp.ne.s32.totalorder %s37, %s40
      %p46 = scmp.eq.s32.totalorder %s13, 0
      %p47 = por %p45, %p46
      %p48 = scmp.ne.s32.totalorder %s37, %s40
      %p49 = scmp.eq.s32.totalorder %s18, 1
      %p50 = por %p48, %p49
      %p51 = scmp.ne.s32.totalorder %s40, %s41
      %p52 = scmp.eq.s32.totalorder %s18, 0
      %p53 = por %p51, %p52
      %p54 = scmp.ne.s32.totalorder %s40, %s41
      %p55 = scmp.eq.s32.totalorder %s19, 1
      %p56 = por %p54, %p55
      %p58 = scmp.ne.s32.totalorder %s41, %s57
      %p59 = scmp.eq.s32.totalorder %s19, 0
      %p60 = por %p58, %p59
      %s61 = ssub.s32 %s20, %s32
      %s62 = ssub.s32 %s21, %s28
      %s63 = sor.u32 %s61, %s62
      %p64 = scmp.eq.s32.totalorder %s63, 0
      %s66 = sadd.s32 %s65, 1
      %s67 = scalar_select %p64, %s65, %s66
      %p70 = pneg %p64
      %p71 = scmp.eq.s32.totalorder %s13, 1
      %p72 = por %p70, %p71
      %p73 = scmp.ne.s32.totalorder %s65, %s68
      %p74 = scmp.eq.s32.totalorder %s13, 0
      %p75 = por %p73, %p74
      %p76 = scmp.ne.s32.totalorder %s65, %s68
      %p77 = scmp.eq.s32.totalorder %s18, 1
      %p78 = por %p76, %p77
      %p79 = scmp.ne.s32.totalorder %s68, %s69
      %p80 = scmp.eq.s32.totalorder %s18, 0
      %p81 = por %p79, %p80
      %p82 = scmp.ne.s32.totalorder %s68, %s69
      %p83 = scmp.eq.s32.totalorder %s19, 1
      %p84 = por %p82, %p83
      %p86 = scmp.ne.s32.totalorder %s69, %s85
      %p87 = scmp.eq.s32.totalorder %s19, 0
      %p88 = por %p86, %p87
      %p89 = scmp.le.s32.totalorder 1, %s13
      %p90 = scmp.lt.s32.totalorder %s13, 3
      %p91 = pnand %p89, %p90
      %p92 = pneg %p91
      // Predicated region
      $region9: #{tpu_custom_call.1} parent=5 // pred_check
        _
      $region10: #{tpu_custom_call.1} parent=5 // pred_check_branch
        %94 = sbr.rel (%p91) target = $region12
      $region11: #{tpu_custom_call.1} parent=5 // pred_region
        %s95 = ssub.s32 %s13, 1
      $region12: #{tpu_custom_call.1} parent=5 // pred_fallthru
        _
      %p96 = scmp.lt.s32.totalorder %s13, 2
      // Predicated region
      $region13: #{tpu_custom_call.1} parent=5 // pred_check
        %p97 = pneg %p96
      $region14: #{tpu_custom_call.1} parent=5 // pred_check_branch
        %99 = sbr.rel (%p97) target = $region16
      $region15: #{tpu_custom_call.1} parent=5 // pred_region
        // Predicated region
        $region17: #{tpu_custom_call.1} parent=15 // pred_check
          %p100 = pneg %p47
        $region18: #{tpu_custom_call.1} parent=15 // pred_check_branch
          %102 = sbr.rel (%p100) target = $region20
        $region19: #{tpu_custom_call.1} parent=15 // pred_region
          %s103 = sand.u32 %s37, 1
          %s104 = scalar_lea.sflag [#allocation3], %s103
          %s105 = sand.u32 %s37, 1
          %s106 = smul.addr %s105, 8
          %s107 = scalar_lea.vmem [#allocation2], %s106
          %109 = vsyncadd %s104, 0
          %s110 = sadd.s32 %s21, %s20
          %s111 = smul.addr %s110, 8
          %s112 = scalar_lea.hbm %s0, %s111
          %s114 = sshll.u32 %s112, 4
          %s115 = int_to_ptr.hbm [resolvable:$true] %s114
          %s116 = sshll.u32 %s107, 4
          %s117 = int_to_ptr.vmem [resolvable:$true] %s116
          %119 = dma.hbm_to_vmem [thread:$0]  %s115, 128, %s117, %s104
        $region20: #{tpu_custom_call.1} parent=15 // pred_fallthru
          _
      $region16: #{tpu_custom_call.1} parent=5 // pred_fallthru
        _
      %p120 = scmp.le.s32.totalorder 1, %s13
      %p121 = scmp.lt.s32.totalorder %s13, 3
      %p122 = pnand %p120, %p121
      %p123 = pneg %p122
      // Predicated region
      $region21: #{tpu_custom_call.1} parent=5 // pred_check
        _
      $region22: #{tpu_custom_call.1} parent=5 // pred_check_branch
        %125 = sbr.rel (%p122) target = $region24
      $region23: #{tpu_custom_call.1} parent=5 // pred_region
        %s126 = ssub.s32 %s13, 1
        %s127 = sand.u32 %s40, 1
        %s128 = scalar_lea.sflag [#allocation3], %s127
        %s129 = sand.u32 %s40, 1
        %s130 = smul.addr %s129, 8
        %s131 = scalar_lea.vmem [#allocation2], %s130
        // Predicated region
        $region25: #{tpu_custom_call.1} parent=23 // pred_check
          %p132 = pneg %p53
        $region26: #{tpu_custom_call.1} parent=23 // pred_check_branch
          %134 = sbr.rel (%p132) target = $region28
        $region27: #{tpu_custom_call.1} parent=23 // pred_region
          %136 = dma.done %s128, 128
        $region28: #{tpu_custom_call.1} parent=23 // pred_fallthru
          _
        %s137 = sand.u32 %s40, 1
        %s138 = scalar_lea.sflag [#allocation3], %s137
        %s139 = sand.u32 %s40, 1
        %s140 = smul.addr %s139, 8
        %s141 = scalar_lea.vmem [#allocation2], %s140
        %p142 = pneg %p53
        %p143 = pneg %p50
        %p144 = pneg %p81
        %p145 = pneg %p78
        %s146 = sand.u32 %s68, 1
        %s147 = scalar_lea.sflag [#allocation4], %s146
        %s148 = sand.u32 %s68, 1
        %s149 = smul.addr %s148, 8
        %s150 = scalar_lea.vmem [#allocation5], %s149
        %v151 = vld [vmem:[%s131] sm:$0xff]
        %153 = vrot.lane.b32.xlu0 %v151, 96
        %v154 = vpop.permute.xlu0 %153
        %v156 = vmax.f32 %v151, %v154
        %vm157 = vcmask 261120
        %158 = vst.msk [vmem:[%s150] sm:$0xff] %vm157, %v156
        %s159 = sand.u32 %s68, 1
        %s160 = scalar_lea.sflag [#allocation4], %s159
        %s161 = sand.u32 %s68, 1
        %s162 = smul.addr %s161, 8
        %s163 = scalar_lea.vmem [#allocation5], %s162
        // Predicated region
        $region29: #{tpu_custom_call.1} parent=23 // pred_check
          %p164 = pneg %p78
        $region30: #{tpu_custom_call.1} parent=23 // pred_check_branch
          %166 = sbr.rel (%p164) target = $region32
        $region31: #{tpu_custom_call.1} parent=23 // pred_region
          %168 = vsyncadd %s160, 0
          %s169 = sadd.s32 %s23, %s22
          %s170 = smul.addr %s169, 8
          %s171 = scalar_lea.hbm %s1, %s170
          %s173 = sshll.u32 %s163, 4
          %s174 = int_to_ptr.vmem [resolvable:$true] %s173
          %s175 = sshll.u32 %s171, 4
          %s176 = int_to_ptr.hbm [resolvable:$true] %s175
          %178 = dma.vmem_to_hbm [thread:$0]  %s174, 128, %s176, %s160
        $region32: #{tpu_custom_call.1} parent=23 // pred_fallthru
          _
      $region24: #{tpu_custom_call.1} parent=5 // pred_fallthru
        _
      %p179 = scmp.le.s32.totalorder 2, %s13
      // Predicated region
      $region33: #{tpu_custom_call.1} parent=5 // pred_check
        %p180 = pneg %p179
      $region34: #{tpu_custom_call.1} parent=5 // pred_check_branch
        %182 = sbr.rel (%p180) target = $region36
      $region35: #{tpu_custom_call.1} parent=5 // pred_region
        %s183 = ssub.s32 %s13, 2
        // Predicated region
        $region37: #{tpu_custom_call.1} parent=35 // pred_check
          %p184 = pneg %p84
        $region38: #{tpu_custom_call.1} parent=35 // pred_check_branch
          %186 = sbr.rel (%p184) target = $region40
        $region39: #{tpu_custom_call.1} parent=35 // pred_region
          %s187 = sand.u32 %s69, 1
          %s188 = scalar_lea.sflag [#allocation4], %s187
          %s189 = sand.u32 %s69, 1
          %s190 = smul.addr %s189, 8
          %s191 = scalar_lea.vmem [#allocation5], %s190
          %193 = dma.done %s188, 128
        $region40: #{tpu_custom_call.1} parent=35 // pred_fallthru
          _
      $region36: #{tpu_custom_call.1} parent=5 // pred_fallthru
        _
    $region6: #{tpu_custom_call.1} parent=1 // loop_footer
      %s17 = sadd.s32 1, %s13
    $region7: #{tpu_custom_call.1} parent=1 // loop_footer_branch
      %12 = sbr.rel target = $region3
    $region8: #{tpu_custom_call.1} parent=1 // loop_exit
      _
    %194 = vsyncpa [#allocation3], 1
    %s195 = scalar_lea.sflag [#allocation3], 1
    %196 = vsyncpa %s195, 1
    %197 = vsyncpa [#allocation4], 1
    %s198 = scalar_lea.sflag [#allocation4], 1
    %199 = vsyncpa %s198, 1

</llo_original>
